<compile_context>
chip_gen: v7x
topology: tpu7x:2x2x1
jax: 0.10.0
libtpu: 0.0.40
codegen_flags: <defaults>
</compile_context>

<pallas_src>
import jax
import jax.numpy as jnp
from jax.experimental import pallas as pl
from jax.experimental.pallas import tpu as pltpu

GRID_SIZE = 25
IN_FEATURES = GRID_SIZE * GRID_SIZE           # 625
HIDDEN = 256
OUT_FEATURES = 128


def _cdiv(a, b):
    return -(-a // b)


def _round_up(n, m):
    return ((n + m - 1) // m) * m


def _facegrid_mlp_kernel(x_ref, w1_ref, b1_ref, w2_ref, b2_ref, o_ref):
    # Layer 1: cast the f32 activation tile to bf16 in-VMEM (cheap VPU op,
    # hidden under the x DMA) and run a bf16 x bf16 MXU matmul with f32
    # accumulation.  K=625 is unaligned; Mosaic masks/pads internally.
    xb = x_ref[...].astype(jnp.bfloat16)
    h = jnp.dot(xb, w1_ref[...], preferred_element_type=jnp.float32)
    h = jnp.maximum(h + b1_ref[...], 0.0)
    # Layer 2: stay in f32 (memory-bound kernel -> f32 MXU path is free and
    # avoids extra bf16 round-off on the hidden activations).
    o = jnp.dot(h, w2_ref[...], preferred_element_type=jnp.float32)
    o_ref[...] = jnp.maximum(o + b2_ref[...], 0.0).astype(o_ref.dtype)


def prepare_params(w1, b1, w2, b2):
    """One-time parameter prep (hoisted out of the per-call path).

    w1: (625, 256), b1: (256,), w2: (256, 128), b2: (128,).
    """
    return (
        w1.astype(jnp.bfloat16),                          # (625, 256) bf16
        b1.reshape(1, HIDDEN).astype(jnp.float32),        # (1, 256)   f32
        w2.astype(jnp.float32),                           # (256, 128) f32
        b2.reshape(1, OUT_FEATURES).astype(jnp.float32),  # (1, 128)   f32
    )


def facegrid_model_forward(x, params, *, max_tile_b=1024):
    """x: (B, C, H, W) or (B, H, W); flattened to (B, 625) like x.view(B, -1).

    params: output of prepare_params.  Returns (B, 128) f32.
    """
    w1p, b1p, w2p, b2p = params
    B = x.shape[0]
    x2d = x.reshape(B, -1).astype(jnp.float32)
    assert x2d.shape[1] == IN_FEATURES

    # Batch tiling: bound padding waste to <16 rows per step and keep at least
    # two grid steps (when B allows) so the "parallel" axis can use both
    # TensorCores on v7x.
    n_steps = _cdiv(B, max_tile_b)
    if B >= 32:
        n_steps = max(n_steps, 2)
    tb = _round_up(_cdiv(B, n_steps), 16)
    b_pad = n_steps * tb
    if b_pad > B:
        x2d = jnp.pad(x2d, ((0, b_pad - B), (0, 0)))

    out = pl.pallas_call(
        _facegrid_mlp_kernel,
        out_shape=jax.ShapeDtypeStruct((b_pad, OUT_FEATURES), jnp.float32),
        grid=(n_steps,),
        in_specs=[
            pl.BlockSpec((tb, IN_FEATURES), lambda i: (i, 0)),       # x tile (full K)
            pl.BlockSpec((IN_FEATURES, HIDDEN), lambda i: (0, 0)),   # w1 (resident)
            pl.BlockSpec((1, HIDDEN), lambda i: (0, 0)),             # b1 (resident)
            pl.BlockSpec((HIDDEN, OUT_FEATURES), lambda i: (0, 0)),  # w2 (resident)
            pl.BlockSpec((1, OUT_FEATURES), lambda i: (0, 0)),       # b2 (resident)
        ],
        out_specs=pl.BlockSpec((tb, OUT_FEATURES), lambda i: (i, 0)),
        compiler_params=pltpu.CompilerParams(
            dimension_semantics=("parallel",),
            vmem_limit_bytes=32 * 1024 * 1024),
    )(x2d, w1p, b1p, w2p, b2p)

    return out[:B]


def init_params(key):
    """Deterministic init mimicking PyTorch nn.Linear default (U[-1/sqrt(fan_in), +])."""
    k1, k2, k3, k4 = jax.random.split(key, 4)
    bound1 = 1.0 / jnp.sqrt(IN_FEATURES)
    bound2 = 1.0 / jnp.sqrt(HIDDEN)
    w1 = jax.random.uniform(k1, (IN_FEATURES, HIDDEN), jnp.float32, -bound1, bound1)
    b1 = jax.random.uniform(k2, (HIDDEN,), jnp.float32, -bound1, bound1)
    w2 = jax.random.uniform(k3, (HIDDEN, OUT_FEATURES), jnp.float32, -bound2, bound2)
    b2 = jax.random.uniform(k4, (OUT_FEATURES,), jnp.float32, -bound2, bound2)
    return w1, b1, w2, b2


def _reference(x, w1, b1, w2, b2):
    x2d = x.reshape(x.shape[0], -1).astype(jnp.float32)
    h = jnp.maximum(x2d @ w1 + b1, 0.0)
    return jnp.maximum(h @ w2 + b2, 0.0)


if __name__ == "__main__":
    key = jax.random.PRNGKey(0)
    kx, kx2, kp = jax.random.split(key, 3)
    w1, b1, w2, b2 = init_params(kp)
    params = prepare_params(w1, b1, w2, b2)   # hoisted: runs once, not per call

    # Small batch (spec-sized): (2, 1, 25, 25) binary face-grid mask, NCHW.
    B = 2
    x = (jax.random.uniform(kx, (B, 1, GRID_SIZE, GRID_SIZE)) > 0.5).astype(jnp.float32)
    out = jax.block_until_ready(facegrid_model_forward(x, params))
    ref = _reference(x, w1, b1, w2, b2)
    assert out.shape == (B, OUT_FEATURES)
    # bf16 first-layer weights vs f32 reference -> loose tolerance.
    assert jnp.allclose(out, ref, atol=2e-2, rtol=2e-2), \
        float(jnp.max(jnp.abs(out - ref)))

    # Larger batch to exercise multi-step batch tiling + padding slice-back
    # (B=300 -> 2 steps of 160 rows instead of the old 512-row pad).
    B2 = 300
    x_big = (jax.random.uniform(kx2, (B2, 1, GRID_SIZE, GRID_SIZE)) > 0.5).astype(jnp.float32)
    out_big = jax.block_until_ready(facegrid_model_forward(x_big, params))
    ref_big = _reference(x_big, w1, b1, w2, b2)
    assert out_big.shape == (B2, OUT_FEATURES)
    assert jnp.allclose(out_big, ref_big, atol=2e-2, rtol=2e-2), \
        float(jnp.max(jnp.abs(out_big - ref_big)))

    print("KERNEL_OK")
</pallas_src>

<mosaic_0001>
module attributes {stable_mosaic.version = 11 : i64} {
  func.func @_facegrid_mlp_kernel(%arg0: i32, %arg1: memref<16x625xf32, #tpu.memory_space<vmem>>, %arg2: memref<625x256xbf16, #tpu.memory_space<vmem>>, %arg3: memref<1x256xf32, #tpu.memory_space<vmem>>, %arg4: memref<256x128xf32, #tpu.memory_space<vmem>>, %arg5: memref<1x128xf32, #tpu.memory_space<vmem>>, %arg6: memref<16x128xf32, #tpu.memory_space<vmem>>) attributes {dimension_semantics = [#tpu.dimension_semantics<parallel>], iteration_bounds = array<i64: 1>, scalar_prefetch = 0 : i64, scratch_operands = 0 : i64, tpu.core_type = #tpu.core_type<tc>, window_params = [{transform_indices = @transform_0, window_bounds = array<i64: 16, 625>}, {pipeline_mode = #tpu.pipeline_mode<synchronous>, transform_indices = @transform_1, window_bounds = array<i64: 625, 256>}, {pipeline_mode = #tpu.pipeline_mode<synchronous>, transform_indices = @transform_2, window_bounds = array<i64: 1, 256>}, {pipeline_mode = #tpu.pipeline_mode<synchronous>, transform_indices = @transform_3, window_bounds = array<i64: 256, 128>}, {pipeline_mode = #tpu.pipeline_mode<synchronous>, transform_indices = @transform_4, window_bounds = array<i64: 1, 128>}, {transform_indices = @transform_5, window_bounds = array<i64: 16, 128>}]} {
    %c0 = arith.constant 0 : index
    %c0_0 = arith.constant 0 : index
    %0 = vector.load %arg1[%c0, %c0_0] : memref<16x625xf32, #tpu.memory_space<vmem>>, vector<16x625xf32>
    %1 = arith.truncf %0 : vector<16x625xf32> to vector<16x625xbf16>
    %c0_1 = arith.constant 0 : index
    %c0_2 = arith.constant 0 : index
    %2 = vector.load %arg2[%c0_1, %c0_2] : memref<625x256xbf16, #tpu.memory_space<vmem>>, vector<625x256xbf16>
    %cst = arith.constant dense<0.000000e+00> : vector<16x256xf32>
    %3 = tpu.matmul %1, %2, %cst {dimension_numbers = #tpu.dot_dimension_numbers<[1], [0], [0], [1], [0, 0, 1, 1], [], []>} : vector<16x625xbf16>, vector<625x256xbf16>, vector<16x256xf32> -> vector<16x256xf32>
    %c0_3 = arith.constant 0 : index
    %c0_4 = arith.constant 0 : index
    %4 = vector.load %arg3[%c0_3, %c0_4] : memref<1x256xf32, #tpu.memory_space<vmem>>, vector<1x256xf32>
    %5 = vector.broadcast %4 : vector<1x256xf32> to vector<16x256xf32>
    %6 = arith.addf %3, %5 : vector<16x256xf32>
    %cst_5 = arith.constant 0.000000e+00 : f32
    %7 = vector.broadcast %cst_5 : f32 to vector<16x256xf32>
    %8 = arith.maximumf %6, %7 : vector<16x256xf32>
    %c0_6 = arith.constant 0 : index
    %c0_7 = arith.constant 0 : index
    %9 = vector.load %arg4[%c0_6, %c0_7] : memref<256x128xf32, #tpu.memory_space<vmem>>, vector<256x128xf32>
    %cst_8 = arith.constant dense<0.000000e+00> : vector<16x128xf32>
    %10 = tpu.matmul %8, %9, %cst_8 {dimension_numbers = #tpu.dot_dimension_numbers<[1], [0], [0], [1], [0, 0, 1, 1], [], []>} : vector<16x256xf32>, vector<256x128xf32>, vector<16x128xf32> -> vector<16x128xf32>
    %c0_9 = arith.constant 0 : index
    %c0_10 = arith.constant 0 : index
    %11 = vector.load %arg5[%c0_9, %c0_10] : memref<1x128xf32, #tpu.memory_space<vmem>>, vector<1x128xf32>
    %12 = vector.broadcast %11 : vector<1x128xf32> to vector<16x128xf32>
    %13 = arith.addf %10, %12 : vector<16x128xf32>
    %cst_11 = arith.constant 0.000000e+00 : f32
    %14 = vector.broadcast %cst_11 : f32 to vector<16x128xf32>
    %15 = arith.maximumf %13, %14 : vector<16x128xf32>
    %c0_12 = arith.constant 0 : index
    %c0_13 = arith.constant 0 : index
    %16 = vector.load %arg6[%c0_12, %c0_13] : memref<16x128xf32, #tpu.memory_space<vmem>>, vector<16x128xf32>
    tpu.vector_store %arg6[%c0_12, %c0_13], %15 {strides = array<i32>} : memref<16x128xf32, #tpu.memory_space<vmem>>, vector<16x128xf32>,
    return
  }
  func.func @transform_0(%arg0: i32) -> (i32, i32) {
    %c0_i32 = arith.constant 0 : i32
    %c0_i32_0 = arith.constant 0 : i32
    return %arg0, %c0_i32 : i32, i32
  }
  func.func @transform_1(%arg0: i32) -> (i32, i32) {
    %c0_i32 = arith.constant 0 : i32
    %c0_i32_0 = arith.constant 0 : i32
    %c0_i32_1 = arith.constant 0 : i32
    return %c0_i32, %c0_i32_0 : i32, i32
  }
  func.func @transform_2(%arg0: i32) -> (i32, i32) {
    %c0_i32 = arith.constant 0 : i32
    %c0_i32_0 = arith.constant 0 : i32
    %c0_i32_1 = arith.constant 0 : i32
    return %c0_i32, %c0_i32_0 : i32, i32
  }
  func.func @transform_3(%arg0: i32) -> (i32, i32) {
    %c0_i32 = arith.constant 0 : i32
    %c0_i32_0 = arith.constant 0 : i32
    %c0_i32_1 = arith.constant 0 : i32
    return %c0_i32, %c0_i32_0 : i32, i32
  }
  func.func @transform_4(%arg0: i32) -> (i32, i32) {
    %c0_i32 = arith.constant 0 : i32
    %c0_i32_0 = arith.constant 0 : i32
    %c0_i32_1 = arith.constant 0 : i32
    return %c0_i32, %c0_i32_0 : i32, i32
  }
  func.func @transform_5(%arg0: i32) -> (i32, i32) {
    %c0_i32 = arith.constant 0 : i32
    %c0_i32_0 = arith.constant 0 : i32
    return %arg0, %c0_i32 : i32, i32
  }
}

</mosaic_0001>

<llo_original>
// kernel: tpu_custom_call.1
$region0: #{tpu_custom_call.1}
  #allocation0 [shape = 'u32[]', space=smem, size = 0x4, offset = 0x4, fixed_abs, tag = 'smem constant byte address 0x4 - core index']
  #allocation1 [shape = 'u32[144,128]{1,0:T(1,128)}', space=vmem, size = 0x12000, scoped, tag = 'internal scratch']
  %s0 = inlined_call_operand.hbm [shape: f32[16,625], index: 0, kind: input, shape index: {}]
  %s1 = inlined_call_operand.hbm [shape: bf16[625,256], index: 1, kind: input, shape index: {}]
  %s2 = inlined_call_operand.vmem [shape: f32[1,256], index: 2, kind: input, shape index: {}]
  %s3 = inlined_call_operand.hbm [shape: f32[256,128], index: 3, kind: input, shape index: {}]
  %s4 = inlined_call_operand.vmem [shape: f32[1,128], index: 4, kind: input, shape index: {}]
  %s5 = inlined_call_operand.hbm [shape: f32[16,128], index: 5, kind: output, shape index: {}]
  %s6 = sld [smem:[#allocation0]]
  $region42: #{tpu_custom_call.1} parent=0
    _
  %s8 = ssub.s32 1, %s6
  %s9 = scalar_select 0, %s8, %s6
  $region1: #{tpu_custom_call.1} parent=0
    #allocation2 [shape = 'u8[40960]{0}', space=vmem, size = 0xa000, scoped, tag = 'input window, operand 0, single buffered']
    #allocation3 [shape = 's32[1]{0}', space=sflag, size = 0x4, scoped, tag = 'scoped memory for tpu_custom_call.1']
    #allocation4 [shape = 's32[1]{0}', space=sflag, size = 0x4, scoped, tag = 'scoped memory for tpu_custom_call.1']
    #allocation5 [shape = 'u8[323584]{0}', space=vmem, size = 0x4f000, scoped, tag = 'input window, operand 1, single buffered']
    #allocation6 [shape = 's32[1]{0}', space=sflag, size = 0x4, scoped, tag = 'scoped memory for tpu_custom_call.1']
    #allocation7 [shape = 'u8[131072]{0}', space=vmem, size = 0x20000, scoped, tag = 'input window, operand 3, single buffered']
    #allocation8 [shape = 'u8[8192]{0}', space=vmem, size = 0x2000, scoped, tag = 'output window, operand 0, single buffered']
    %10 = vsyncpa [#allocation3], 0
    %11 = vsyncpa [#allocation6], 0
    %12 = vsyncpa [#allocation4], 0
    // Predicated region
    $region2: #{tpu_custom_call.1} parent=1 // pred_check
      _
    $region3: #{tpu_custom_call.1} parent=1 // pred_check_branch
      %14 = sbr.rel (0) target = $region5
    $region4: #{tpu_custom_call.1} parent=1 // pred_region
      %s16 = ssub.s32 1280, 1280
      %17 = vsyncadd [#allocation3], %s16
      %s18 = sshll.u32 [#allocation2], 4
      %s19 = int_to_ptr.vmem [resolvable:$true] %s18
      %24 = dma.hbm_to_vmem [thread:$0]  %s0, 1280, %s19, [#allocation3], 640, 640, 40
    $region5: #{tpu_custom_call.1} parent=1 // pred_fallthru
      _
    // Predicated region
    $region6: #{tpu_custom_call.1} parent=1 // pred_check
      _
    $region7: #{tpu_custom_call.1} parent=1 // pred_check_branch
      %26 = sbr.rel (0) target = $region9
    $region8: #{tpu_custom_call.1} parent=1 // pred_region
      %s28 = ssub.s32 10112, 10112
      %29 = vsyncadd [#allocation6], %s28
      %s30 = sshll.u32 [#allocation5], 4
      %s31 = int_to_ptr.vmem [resolvable:$true] %s30
      %36 = dma.hbm_to_vmem [thread:$0]  %s1, 10112, %s31, [#allocation6], 128, 128, 8
    $region9: #{tpu_custom_call.1} parent=1 // pred_fallthru
      _
    // Predicated region
    $region10: #{tpu_custom_call.1} parent=1 // pred_check
      _
    $region11: #{tpu_custom_call.1} parent=1 // pred_check_branch
      %38 = sbr.rel (0) target = $region13
    $region12: #{tpu_custom_call.1} parent=1 // pred_region
      _
    $region13: #{tpu_custom_call.1} parent=1 // pred_fallthru
      _
    // Predicated region
    $region14: #{tpu_custom_call.1} parent=1 // pred_check
      _
    $region15: #{tpu_custom_call.1} parent=1 // pred_check_branch
      %40 = sbr.rel (0) target = $region17
    $region16: #{tpu_custom_call.1} parent=1 // pred_region
      %s42 = ssub.s32 4096, 4096
      %43 = vsyncadd [#allocation6], %s42
      %s44 = sshll.u32 [#allocation7], 4
      %s45 = int_to_ptr.vmem [resolvable:$true] %s44
      %50 = dma.hbm_to_vmem [thread:$0]  %s3, 4096, %s45, [#allocation6], 128, 128, 8
    $region17: #{tpu_custom_call.1} parent=1 // pred_fallthru
      _
    // Predicated region
    $region18: #{tpu_custom_call.1} parent=1 // pred_check
      _
    $region19: #{tpu_custom_call.1} parent=1 // pred_check_branch
      %52 = sbr.rel (0) target = $region21
    $region20: #{tpu_custom_call.1} parent=1 // pred_region
      _
    $region21: #{tpu_custom_call.1} parent=1 // pred_fallthru
      _
    // Predicated region
    $region22: #{tpu_custom_call.1} parent=1 // pred_check
      _
    $region23: #{tpu_custom_call.1} parent=1 // pred_check_branch
      %54 = sbr.rel (0) target = $region25
    $region24: #{tpu_custom_call.1} parent=1 // pred_region
      %55 = dma.done [#allocation3], 1280
    $region25: #{tpu_custom_call.1} parent=1 // pred_fallthru
      _
    // Predicated region
    $region26: #{tpu_custom_call.1} parent=1 // pred_check
      _
    $region27: #{tpu_custom_call.1} parent=1 // pred_check_branch
      %57 = sbr.rel (0) target = $region29
    $region28: #{tpu_custom_call.1} parent=1 // pred_region
      %58 = dma.done [#allocation6], 10112
    $region29: #{tpu_custom_call.1} parent=1 // pred_fallthru
      _
    // Predicated region
    $region30: #{tpu_custom_call.1} parent=1 // pred_check
      _
    $region31: #{tpu_custom_call.1} parent=1 // pred_check_branch
      %60 = sbr.rel (0) target = $region33
    $region32: #{tpu_custom_call.1} parent=1 // pred_region
      %61 = dma.done [#allocation6], 4096
    $region33: #{tpu_custom_call.1} parent=1 // pred_fallthru
      _
    %v63 = vld [vmem:[#allocation2] sm:$0xff]
    %v64 = vld [vmem:[#allocation2 + $0x8] sm:$0xff]
    %v65 = vld [vmem:[#allocation2 + $0x10] sm:$0xff]
    %v66 = vld [vmem:[#allocation2 + $0x18] sm:$0xff]
    %v67 = vld [vmem:[#allocation2 + $0x20] sm:$0xff]
    %v68 = vld [vmem:[#allocation2 + $0x28] sm:$0xff]
    %v69 = vld [vmem:[#allocation2 + $0x30] sm:$0xff]
    %v70 = vld [vmem:[#allocation2 + $0x38] sm:$0xff]
    %v71 = vld [vmem:[#allocation2 + $0x40] sm:$0xff]
    %v72 = vld [vmem:[#allocation2 + $0x48] sm:$0xff]
    %v73 = vpack.c.bf16 %v68, %v63
    %v74 = vpack.c.bf16 %v69, %v64
    %v75 = vpack.c.bf16 %v70, %v65
    %v76 = vpack.c.bf16 %v71, %v66
    %v77 = vpack.c.bf16 %v72, %v67
    %v78 = vld [vmem:[#allocation5] sm:$0xff]
    %v79 = vld [vmem:[#allocation5 + $0x8] sm:$0xff]
    %v80 = vld [vmem:[#allocation5 + $0x10] sm:$0xff]
    %v81 = vld [vmem:[#allocation5 + $0x18] sm:$0xff]
    %v82 = vld [vmem:[#allocation5 + $0x20] sm:$0xff]
    %v83 = vld [vmem:[#allocation5 + $0x28] sm:$0xff]
    %v84 = vld [vmem:[#allocation5 + $0x30] sm:$0xff]
    %v85 = vld [vmem:[#allocation5 + $0x38] sm:$0xff]
    %v86 = vld [vmem:[#allocation5 + $0x40] sm:$0xff]
    %v87 = vld [vmem:[#allocation5 + $0x48] sm:$0xff]
    %v88 = vld [vmem:[#allocation5 + $0x50] sm:$0xff]
    %v89 = vld [vmem:[#allocation5 + $0x58] sm:$0xff]
    %v90 = vld [vmem:[#allocation5 + $0x60] sm:$0xff]
    %v91 = vld [vmem:[#allocation5 + $0x68] sm:$0xff]
    %v92 = vld [vmem:[#allocation5 + $0x70] sm:$0xff]
    %v93 = vld [vmem:[#allocation5 + $0x78] sm:$0xff]
    %v94 = vld [vmem:[#allocation5 + $0x80] sm:$0xff]
    %v95 = vld [vmem:[#allocation5 + $0x88] sm:$0xff]
    %v96 = vld [vmem:[#allocation5 + $0x90] sm:$0xff]
    %v97 = vld [vmem:[#allocation5 + $0x98] sm:$0xff]
    %v98 = vld [vmem:[#allocation5 + $0xa0] sm:$0xff]
    %v99 = vld [vmem:[#allocation5 + $0xa8] sm:$0xff]
    %v100 = vld [vmem:[#allocation5 + $0xb0] sm:$0xff]
    %v101 = vld [vmem:[#allocation5 + $0xb8] sm:$0xff]
    %v102 = vld [vmem:[#allocation5 + $0xc0] sm:$0xff]
    %v103 = vld [vmem:[#allocation5 + $0xc8] sm:$0xff]
    %v104 = vld [vmem:[#allocation5 + $0xd0] sm:$0xff]
    %v105 = vld [vmem:[#allocation5 + $0xd8] sm:$0xff]
    %v106 = vld [vmem:[#allocation5 + $0xe0] sm:$0xff]
    %v107 = vld [vmem:[#allocation5 + $0xe8] sm:$0xff]
    %v108 = vld [vmem:[#allocation5 + $0xf0] sm:$0xff]
    %v109 = vld [vmem:[#allocation5 + $0xf8] sm:$0xff]
    %v110 = vld [vmem:[#allocation5 + $0x100] sm:$0xff]
    %v111 = vld [vmem:[#allocation5 + $0x108] sm:$0xff]
    %v112 = vld [vmem:[#allocation5 + $0x110] sm:$0xff]
    %v113 = vld [vmem:[#allocation5 + $0x118] sm:$0xff]
    %v114 = vld [vmem:[#allocation5 + $0x120] sm:$0xff]
    %v115 = vld [vmem:[#allocation5 + $0x128] sm:$0xff]
    %v116 = vld [vmem:[#allocation5 + $0x130] sm:$0xff]
    %v117 = vld [vmem:[#allocation5 + $0x138] sm:$0xff]
    %v118 = vld [vmem:[#allocation5 + $0x140] sm:$0xff]
    %v119 = vld [vmem:[#allocation5 + $0x148] sm:$0xff]
    %v120 = vld [vmem:[#allocation5 + $0x150] sm:$0xff]
    %v121 = vld [vmem:[#allocation5 + $0x158] sm:$0xff]
    %v122 = vld [vmem:[#allocation5 + $0x160] sm:$0xff]
    %v123 = vld [vmem:[#allocation5 + $0x168] sm:$0xff]
    %v124 = vld [vmem:[#allocation5 + $0x170] sm:$0xff]
    %v125 = vld [vmem:[#allocation5 + $0x178] sm:$0xff]
    %v126 = vld [vmem:[#allocation5 + $0x180] sm:$0xff]
    %v127 = vld [vmem:[#allocation5 + $0x188] sm:$0xff]
    %v128 = vld [vmem:[#allocation5 + $0x190] sm:$0xff]
    %v129 = vld [vmem:[#allocation5 + $0x198] sm:$0xff]
    %v130 = vld [vmem:[#allocation5 + $0x1a0] sm:$0xff]
    %v131 = vld [vmem:[#allocation5 + $0x1a8] sm:$0xff]
    %v132 = vld [vmem:[#allocation5 + $0x1b0] sm:$0xff]
    %v133 = vld [vmem:[#allocation5 + $0x1b8] sm:$0xff]
    %v134 = vld [vmem:[#allocation5 + $0x1c0] sm:$0xff]
    %v135 = vld [vmem:[#allocation5 + $0x1c8] sm:$0xff]
    %v136 = vld [vmem:[#allocation5 + $0x1d0] sm:$0xff]
    %v137 = vld [vmem:[#allocation5 + $0x1d8] sm:$0xff]
    %v138 = vld [vmem:[#allocation5 + $0x1e0] sm:$0xff]
    %v139 = vld [vmem:[#allocation5 + $0x1e8] sm:$0xff]
    %v140 = vld [vmem:[#allocation5 + $0x1f0] sm:$0xff]
    %v141 = vld [vmem:[#allocation5 + $0x1f8] sm:$0xff]
    %v142 = vld [vmem:[#allocation5 + $0x200] sm:$0xff]
    %v143 = vld [vmem:[#allocation5 + $0x208] sm:$0xff]
    %v144 = vld [vmem:[#allocation5 + $0x210] sm:$0xff]
    %v145 = vld [vmem:[#allocation5 + $0x218] sm:$0xff]
    %v146 = vld [vmem:[#allocation5 + $0x220] sm:$0xff]
    %v147 = vld [vmem:[#allocation5 + $0x228] sm:$0xff]
    %v148 = vld [vmem:[#allocation5 + $0x230] sm:$0xff]
    %v149 = vld [vmem:[#allocation5 + $0x238] sm:$0xff]
    %v150 = vld [vmem:[#allocation5 + $0x240] sm:$0xff]
    %v151 = vld [vmem:[#allocation5 + $0x248] sm:$0xff]
    %v152 = vld [vmem:[#allocation5 + $0x250] sm:$0xff]
    %v153 = vld [vmem:[#allocation5 + $0x258] sm:$0xff]
    %v154 = vld [vmem:[#allocation5 + $0x260] sm:$0xff]
    %v155 = vld [vmem:[#allocation5 + $0x268] sm:$0xff]
    %v156 = vld [vmem:[#allocation5 + $0x270] sm:$0x11]
    %v157 = vld [vmem:[%s2] sm:$0x3]
    %v159 = vlaneseq
    %v160 = vshrl.u32 %v159, 7
    %v161 = vsub.s32 0, %v160
    %v162 = vrot.slane %v157, %v161
    %v163 = vlaneseq
    %v164 = vshrl.u32 %v163, 7
    %v165 = vsub.s32 1, %v164
    %v166 = vrot.slane %v157, %v165
    %v248 = vunpack.c.l.b16 %v78
    %v249 = vunpack.c.h.b16 %v78
    %v250 = vunpack.c.l.b16 %v79
    %v251 = vunpack.c.h.b16 %v79
    %v252 = vunpack.c.l.b16 %v80
    %v253 = vunpack.c.h.b16 %v80
    %v254 = vunpack.c.l.b16 %v81
    %v255 = vunpack.c.h.b16 %v81
    %v256 = vunpack.c.l.b16 %v82
    %v257 = vunpack.c.h.b16 %v82
    %v258 = vunpack.c.l.b16 %v83
    %v259 = vunpack.c.h.b16 %v83
    %v260 = vunpack.c.l.b16 %v84
    %v261 = vunpack.c.h.b16 %v84
    %v262 = vunpack.c.l.b16 %v85
    %v263 = vunpack.c.h.b16 %v85
    %v264 = vunpack.c.l.b16 %v86
    %v265 = vunpack.c.h.b16 %v86
    %v266 = vunpack.c.l.b16 %v87
    %v267 = vunpack.c.h.b16 %v87
    %v268 = vunpack.c.l.b16 %v88
    %v269 = vunpack.c.h.b16 %v88
    %v270 = vunpack.c.l.b16 %v89
    %v271 = vunpack.c.h.b16 %v89
    %v272 = vunpack.c.l.b16 %v90
    %v273 = vunpack.c.h.b16 %v90
    %v274 = vunpack.c.l.b16 %v91
    %v275 = vunpack.c.h.b16 %v91
    %v276 = vunpack.c.l.b16 %v92
    %v277 = vunpack.c.h.b16 %v92
    %v278 = vunpack.c.l.b16 %v93
    %v279 = vunpack.c.h.b16 %v93
    %v280 = vunpack.c.l.b16 %v94
    %v281 = vunpack.c.h.b16 %v94
    %v282 = vunpack.c.l.b16 %v95
    %v283 = vunpack.c.h.b16 %v95
    %v284 = vunpack.c.l.b16 %v96
    %v285 = vunpack.c.h.b16 %v96
    %v286 = vunpack.c.l.b16 %v97
    %v287 = vunpack.c.h.b16 %v97
    %v288 = vunpack.c.l.b16 %v98
    %v289 = vunpack.c.h.b16 %v98
    %v290 = vunpack.c.l.b16 %v99
    %v291 = vunpack.c.h.b16 %v99
    %v292 = vunpack.c.l.b16 %v100
    %v293 = vunpack.c.h.b16 %v100
    %v294 = vunpack.c.l.b16 %v101
    %v295 = vunpack.c.h.b16 %v101
    %v296 = vunpack.c.l.b16 %v102
    %v297 = vunpack.c.h.b16 %v102
    %v298 = vunpack.c.l.b16 %v103
    %v299 = vunpack.c.h.b16 %v103
    %v300 = vunpack.c.l.b16 %v104
    %v301 = vunpack.c.h.b16 %v104
    %v302 = vunpack.c.l.b16 %v105
    %v303 = vunpack.c.h.b16 %v105
    %v304 = vunpack.c.l.b16 %v106
    %v305 = vunpack.c.h.b16 %v106
    %v306 = vunpack.c.l.b16 %v107
    %v307 = vunpack.c.h.b16 %v107
    %v308 = vunpack.c.l.b16 %v108
    %v309 = vunpack.c.h.b16 %v108
    %v310 = vunpack.c.l.b16 %v109
    %v311 = vunpack.c.h.b16 %v109
    %v312 = vunpack.c.l.b16 %v110
    %v313 = vunpack.c.h.b16 %v110
    %v314 = vunpack.c.l.b16 %v111
    %v315 = vunpack.c.h.b16 %v111
    %v316 = vunpack.c.l.b16 %v112
    %v317 = vunpack.c.h.b16 %v112
    %v318 = vunpack.c.l.b16 %v113
    %v319 = vunpack.c.h.b16 %v113
    %v320 = vunpack.c.l.b16 %v114
    %v321 = vunpack.c.h.b16 %v114
    %v322 = vunpack.c.l.b16 %v115
    %v323 = vunpack.c.h.b16 %v115
    %v324 = vunpack.c.l.b16 %v116
    %v325 = vunpack.c.h.b16 %v116
    %v326 = vunpack.c.l.b16 %v117
    %v327 = vunpack.c.h.b16 %v117
    %v328 = vunpack.c.l.b16 %v118
    %v329 = vunpack.c.h.b16 %v118
    %v330 = vunpack.c.l.b16 %v119
    %v331 = vunpack.c.h.b16 %v119
    %v332 = vunpack.c.l.b16 %v120
    %v333 = vunpack.c.h.b16 %v120
    %v334 = vunpack.c.l.b16 %v121
    %v335 = vunpack.c.h.b16 %v121
    %v336 = vunpack.c.l.b16 %v122
    %v337 = vunpack.c.h.b16 %v122
    %v338 = vunpack.c.l.b16 %v123
    %v339 = vunpack.c.h.b16 %v123
    %v340 = vunpack.c.l.b16 %v124
    %v341 = vunpack.c.h.b16 %v124
    %v342 = vunpack.c.l.b16 %v125
    %v343 = vunpack.c.h.b16 %v125
    %v344 = vunpack.c.l.b16 %v126
    %v345 = vunpack.c.h.b16 %v126
    %v346 = vunpack.c.l.b16 %v127
    %v347 = vunpack.c.h.b16 %v127
    %v348 = vunpack.c.l.b16 %v128
    %v349 = vunpack.c.h.b16 %v128
    %v350 = vunpack.c.l.b16 %v129
    %v351 = vunpack.c.h.b16 %v129
    %v352 = vunpack.c.l.b16 %v130
    %v353 = vunpack.c.h.b16 %v130
    %v354 = vunpack.c.l.b16 %v131
    %v355 = vunpack.c.h.b16 %v131
    %v356 = vunpack.c.l.b16 %v132
    %v357 = vunpack.c.h.b16 %v132
    %v358 = vunpack.c.l.b16 %v133
    %v359 = vunpack.c.h.b16 %v133
    %v360 = vunpack.c.l.b16 %v134
    %v361 = vunpack.c.h.b16 %v134
    %v362 = vunpack.c.l.b16 %v135
    %v363 = vunpack.c.h.b16 %v135
    %v364 = vunpack.c.l.b16 %v136
    %v365 = vunpack.c.h.b16 %v136
    %v366 = vunpack.c.l.b16 %v137
    %v367 = vunpack.c.h.b16 %v137
    %v368 = vunpack.c.l.b16 %v138
    %v369 = vunpack.c.h.b16 %v138
    %v370 = vunpack.c.l.b16 %v139
    %v371 = vunpack.c.h.b16 %v139
    %v372 = vunpack.c.l.b16 %v140
    %v373 = vunpack.c.h.b16 %v140
    %v374 = vunpack.c.l.b16 %v141
    %v375 = vunpack.c.h.b16 %v141
    %v376 = vunpack.c.l.b16 %v142
    %v377 = vunpack.c.h.b16 %v142
    %v378 = vunpack.c.l.b16 %v143
    %v379 = vunpack.c.h.b16 %v143
    %v380 = vunpack.c.l.b16 %v144
    %v381 = vunpack.c.h.b16 %v144
    %v382 = vunpack.c.l.b16 %v145
    %v383 = vunpack.c.h.b16 %v145
    %v384 = vunpack.c.l.b16 %v146
    %v385 = vunpack.c.h.b16 %v146
    %v386 = vunpack.c.l.b16 %v147
    %v387 = vunpack.c.h.b16 %v147
    %v388 = vunpack.c.l.b16 %v148
    %v389 = vunpack.c.h.b16 %v148
    %v390 = vunpack.c.l.b16 %v149
    %v391 = vunpack.c.h.b16 %v149
    %v392 = vunpack.c.l.b16 %v150
    %v393 = vunpack.c.h.b16 %v150
    %v394 = vunpack.c.l.b16 %v151
    %v395 = vunpack.c.h.b16 %v151
    %v396 = vunpack.c.l.b16 %v152
    %v397 = vunpack.c.h.b16 %v152
    %v398 = vunpack.c.l.b16 %v153
    %v399 = vunpack.c.h.b16 %v153
    %v400 = vunpack.c.l.b16 %v154
    %v401 = vunpack.c.h.b16 %v154
    %v402 = vunpack.c.l.b16 %v155
    %v403 = vunpack.c.h.b16 %v155
    %v404 = vunpack.c.l.b16 %v156
    %v405 = vunpack.c.h.b16 %v156
    %v406 = vpack.c.b16 %v250, %v248
    %v407 = vpack.c.b16 %v251, %v249
    %v408 = vpack.c.b16 %v254, %v252
    %v409 = vpack.c.b16 %v255, %v253
    %v410 = vpack.c.b16 %v258, %v256
    %v411 = vpack.c.b16 %v259, %v257
    %v412 = vpack.c.b16 %v262, %v260
    %v413 = vpack.c.b16 %v263, %v261
    %v414 = vpack.c.b16 %v266, %v264
    %v415 = vpack.c.b16 %v267, %v265
    %v416 = vpack.c.b16 %v270, %v268
    %v417 = vpack.c.b16 %v271, %v269
    %v418 = vpack.c.b16 %v274, %v272
    %v419 = vpack.c.b16 %v275, %v273
    %v420 = vpack.c.b16 %v278, %v276
    %v421 = vpack.c.b16 %v279, %v277
    %v422 = vpack.c.b16 %v282, %v280
    %v423 = vpack.c.b16 %v283, %v281
    %v424 = vpack.c.b16 %v286, %v284
    %v425 = vpack.c.b16 %v287, %v285
    %v426 = vpack.c.b16 %v290, %v288
    %v427 = vpack.c.b16 %v291, %v289
    %v428 = vpack.c.b16 %v294, %v292
    %v429 = vpack.c.b16 %v295, %v293
    %v430 = vpack.c.b16 %v298, %v296
    %v431 = vpack.c.b16 %v299, %v297
    %v432 = vpack.c.b16 %v302, %v300
    %v433 = vpack.c.b16 %v303, %v301
    %v434 = vpack.c.b16 %v306, %v304
    %v435 = vpack.c.b16 %v307, %v305
    %v436 = vpack.c.b16 %v310, %v308
    %v437 = vpack.c.b16 %v311, %v309
    %v438 = vpack.c.b16 %v314, %v312
    %v439 = vpack.c.b16 %v315, %v313
    %v440 = vpack.c.b16 %v318, %v316
    %v441 = vpack.c.b16 %v319, %v317
    %v442 = vpack.c.b16 %v322, %v320
    %v443 = vpack.c.b16 %v323, %v321
    %v444 = vpack.c.b16 %v326, %v324
    %v445 = vpack.c.b16 %v327, %v325
    %v446 = vpack.c.b16 %v330, %v328
    %v447 = vpack.c.b16 %v331, %v329
    %v448 = vpack.c.b16 %v334, %v332
    %v449 = vpack.c.b16 %v335, %v333
    %v450 = vpack.c.b16 %v338, %v336
    %v451 = vpack.c.b16 %v339, %v337
    %v452 = vpack.c.b16 %v342, %v340
    %v453 = vpack.c.b16 %v343, %v341
    %v454 = vpack.c.b16 %v346, %v344
    %v455 = vpack.c.b16 %v347, %v345
    %v456 = vpack.c.b16 %v350, %v348
    %v457 = vpack.c.b16 %v351, %v349
    %v458 = vpack.c.b16 %v354, %v352
    %v459 = vpack.c.b16 %v355, %v353
    %v460 = vpack.c.b16 %v358, %v356
    %v461 = vpack.c.b16 %v359, %v357
    %v462 = vpack.c.b16 %v362, %v360
    %v463 = vpack.c.b16 %v363, %v361
    %v464 = vpack.c.b16 %v366, %v364
    %v465 = vpack.c.b16 %v367, %v365
    %v466 = vpack.c.b16 %v370, %v368
    %v467 = vpack.c.b16 %v371, %v369
    %v468 = vpack.c.b16 %v374, %v372
    %v469 = vpack.c.b16 %v375, %v373
    %v470 = vpack.c.b16 %v378, %v376
    %v471 = vpack.c.b16 %v379, %v377
    %v472 = vpack.c.b16 %v382, %v380
    %v473 = vpack.c.b16 %v383, %v381
    %v474 = vpack.c.b16 %v386, %v384
    %v475 = vpack.c.b16 %v387, %v385
    %v476 = vpack.c.b16 %v390, %v388
    %v477 = vpack.c.b16 %v391, %v389
    %v478 = vpack.c.b16 %v394, %v392
    %v479 = vpack.c.b16 %v395, %v393
    %v480 = vpack.c.b16 %v398, %v396
    %v481 = vpack.c.b16 %v399, %v397
    %v482 = vpack.c.b16 %v402, %v400
    %v483 = vpack.c.b16 %v403, %v401
    %v484 = vpack.c.b16 %v404, %v404
    %v485 = vpack.c.b16 %v405, %v405
    %vm564 = vcmask 924672
    %v566 = vsel %vm564, %v77, 0
    %vm568 = vcmask 1040384
    %v569 = vsel 0, 4294967295, 65535
    %v570 = vsel %vm568, %v569, 0
    %v572 = vand.u32 %v484, %v570
    %v575 = vand.u32 %v485, %v570
    %577 = vmatprep.subr.bf16.mxu0 %v407
    %578 = vmatpush1.bf16.msra.mxu0 %v406
    %579 = vmatprep.subr.bf16.mxu0 %v409
    %580 = vmatpush1.bf16.msra.mxu0 %v408
    %581 = vmatprep.subr.bf16.mxu0 %v411
    %582 = vmatpush1.bf16.msra.mxu0 %v410
    %583 = vmatprep.subr.bf16.mxu0 %v413
    %584 = vmatpush1.bf16.msra.mxu0 %v412
    %585 = vmatprep.subr.bf16.mxu0 %v415
    %586 = vmatpush1.bf16.msra.mxu0 %v414
    %587 = vmatprep.subr.bf16.mxu0 %v417
    %588 = vmatpush1.bf16.msra.mxu0 %v416
    %589 = vmatprep.subr.bf16.mxu0 %v419
    %590 = vmatpush1.bf16.msra.mxu0 %v418
    %591 = vmatprep.subr.bf16.mxu0 %v421
    %592 = vmatpush1.bf16.msra.mxu0 %v420
    %593 = vmatprep.subr.bf16.mxu0 %v423
    %594 = vmatpush1.bf16.msra.mxu0 %v422
    %595 = vmatprep.subr.bf16.mxu0 %v425
    %596 = vmatpush1.bf16.msra.mxu0 %v424
    %597 = vmatprep.subr.bf16.mxu0 %v427
    %598 = vmatpush1.bf16.msra.mxu0 %v426
    %599 = vmatprep.subr.bf16.mxu0 %v429
    %600 = vmatpush1.bf16.msra.mxu0 %v428
    %601 = vmatprep.subr.bf16.mxu0 %v431
    %602 = vmatpush1.bf16.msra.mxu0 %v430
    %603 = vmatprep.subr.bf16.mxu0 %v433
    %604 = vmatpush1.bf16.msra.mxu0 %v432
    %605 = vmatprep.subr.bf16.mxu0 %v435
    %606 = vmatpush1.bf16.msra.mxu0 %v434
    %607 = vmatprep.subr.bf16.mxu0 %v437
    %608 = vmatpush1.bf16.msra.mxu0 %v436
    %609 = vmatprep.mubr.bf16.mxu0 %v74
    %610 = vmatmul.mubr.bf16.gmra.mrb[0].mxu0 %v73
    %v611 = vpop.f32.mrb[0].mxu0
    %v612 = vadd.f32 %v162, %v611
    %v613 = vpop.f32.mrb[0].mxu0
    %v614 = vadd.f32 %v166, %v613
    %v615 = vpop.f32.mrb[0].mxu0
    %v616 = vadd.f32 %v162, %v615
    %v617 = vpop.f32.mrb[0].mxu0
    %v618 = vadd.f32 %v166, %v617
    %619 = vdwg.mxu0
    %620 = vmatprep.subr.bf16.mxu0 %v439
    %621 = vmatpush1.bf16.msra.mxu0 %v438
    %622 = vmatprep.subr.bf16.mxu0 %v441
    %623 = vmatpush1.bf16.msra.mxu0 %v440
    %624 = vmatprep.subr.bf16.mxu0 %v443
    %625 = vmatpush1.bf16.msra.mxu0 %v442
    %626 = vmatprep.subr.bf16.mxu0 %v445
    %627 = vmatpush1.bf16.msra.mxu0 %v444
    %628 = vmatprep.subr.bf16.mxu0 %v447
    %629 = vmatpush1.bf16.msra.mxu0 %v446
    %630 = vmatprep.subr.bf16.mxu0 %v449
    %631 = vmatpush1.bf16.msra.mxu0 %v448
    %632 = vmatprep.subr.bf16.mxu0 %v451
    %633 = vmatpush1.bf16.msra.mxu0 %v450
    %634 = vmatprep.subr.bf16.mxu0 %v453
    %635 = vmatpush1.bf16.msra.mxu0 %v452
    %636 = vmatprep.subr.bf16.mxu0 %v455
    %637 = vmatpush1.bf16.msra.mxu0 %v454
    %638 = vmatprep.subr.bf16.mxu0 %v457
    %639 = vmatpush1.bf16.msra.mxu0 %v456
    %640 = vmatprep.subr.bf16.mxu0 %v459
    %641 = vmatpush1.bf16.msra.mxu0 %v458
    %642 = vmatprep.subr.bf16.mxu0 %v461
    %643 = vmatpush1.bf16.msra.mxu0 %v460
    %644 = vmatprep.subr.bf16.mxu0 %v463
    %645 = vmatpush1.bf16.msra.mxu0 %v462
    %646 = vmatprep.subr.bf16.mxu0 %v465
    %647 = vmatpush1.bf16.msra.mxu0 %v464
    %648 = vmatprep.subr.bf16.mxu0 %v467
    %649 = vmatpush1.bf16.msra.mxu0 %v466
    %650 = vmatprep.subr.bf16.mxu0 %v469
    %651 = vmatpush1.bf16.msra.mxu0 %v468
    %652 = vmatprep.mubr.bf16.mxu0 %v76
    %653 = vmatmul.mubr.bf16.gmra.mrb[0].mxu0 %v75
    %v654 = vpop.f32.mrb[0].mxu0
    %v655 = vadd.f32 %v612, %v654
    %v656 = vpop.f32.mrb[0].mxu0
    %v657 = vadd.f32 %v614, %v656
    %v658 = vpop.f32.mrb[0].mxu0
    %v659 = vadd.f32 %v616, %v658
    %v660 = vpop.f32.mrb[0].mxu0
    %v661 = vadd.f32 %v618, %v660
    %662 = vdwg.mxu0
    %663 = vmatprep.subr.bf16.mxu0 %v471
    %664 = vmatpush1.bf16.msra.mxu0 %v470
    %665 = vmatprep.subr.bf16.mxu0 %v473
    %666 = vmatpush1.bf16.msra.mxu0 %v472
    %667 = vmatprep.subr.bf16.mxu0 %v475
    %668 = vmatpush1.bf16.msra.mxu0 %v474
    %669 = vmatprep.subr.bf16.mxu0 %v477
    %670 = vmatpush1.bf16.msra.mxu0 %v476
    %671 = vmatprep.subr.bf16.mxu0 %v479
    %672 = vmatpush1.bf16.msra.mxu0 %v478
    %673 = vmatprep.subr.bf16.mxu0 %v481
    %674 = vmatpush1.bf16.msra.mxu0 %v480
    %675 = vmatprep.subr.bf16.mxu0 %v483
    %676 = vmatpush1.bf16.msra.mxu0 %v482
    %677 = vmatprep.subr.bf16.mxu0 %v575
    %678 = vmatpush1.bf16.msra.mxu0 %v572
    %679 = vmatprep.subr.bf16.mxu0 0
    %680 = vmatpush1.bf16.msra.mxu0 0
    %681 = vmatprep.subr.bf16.mxu0 0
    %682 = vmatpush1.bf16.msra.mxu0 0
    %683 = vmatprep.subr.bf16.mxu0 0
    %684 = vmatpush1.bf16.msra.mxu0 0
    %685 = vmatprep.subr.bf16.mxu0 0
    %686 = vmatpush1.bf16.msra.mxu0 0
    %687 = vmatprep.subr.bf16.mxu0 0
    %688 = vmatpush1.bf16.msra.mxu0 0
    %689 = vmatprep.subr.bf16.mxu0 0
    %690 = vmatpush1.bf16.msra.mxu0 0
    %691 = vmatprep.subr.bf16.mxu0 0
    %692 = vmatpush1.bf16.msra.mxu0 0
    %693 = vmatprep.subr.bf16.mxu0 0
    %694 = vmatpush1.bf16.msra.mxu0 0
    %695 = vmatprep.mubr.bf16.mxu0 0
    %696 = vmatmul.mubr.bf16.gmra.mrb[0].mxu0 %v566
    %v697 = vpop.f32.mrb[0].mxu0
    %v698 = vadd.f32 %v655, %v697
    %v699 = vpop.f32.mrb[0].mxu0
    %v700 = vadd.f32 %v657, %v699
    %v701 = vpop.f32.mrb[0].mxu0
    %v702 = vadd.f32 %v659, %v701
    %v703 = vpop.f32.mrb[0].mxu0
    %v704 = vadd.f32 %v661, %v703
    %705 = vdwg.mxu0
    %v706 = vmax.f32 %v698, 0.0
    %v707 = vmax.f32 %v700, 0.0
    %v708 = vmax.f32 %v702, 0.0
    %v709 = vmax.f32 %v704, 0.0
    %v710 = vld [vmem:[#allocation7] sm:$0xff]
    %v711 = vld [vmem:[#allocation7 + $0x8] sm:$0xff]
    %v712 = vld [vmem:[#allocation7 + $0x10] sm:$0xff]
    %v713 = vld [vmem:[#allocation7 + $0x18] sm:$0xff]
    %v714 = vld [vmem:[#allocation7 + $0x20] sm:$0xff]
    %v715 = vld [vmem:[#allocation7 + $0x28] sm:$0xff]
    %v716 = vld [vmem:[#allocation7 + $0x30] sm:$0xff]
    %v717 = vld [vmem:[#allocation7 + $0x38] sm:$0xff]
    %v718 = vld [vmem:[#allocation7 + $0x40] sm:$0xff]
    %v719 = vld [vmem:[#allocation7 + $0x48] sm:$0xff]
    %v720 = vld [vmem:[#allocation7 + $0x50] sm:$0xff]
    %v721 = vld [vmem:[#allocation7 + $0x58] sm:$0xff]
    %v722 = vld [vmem:[#allocation7 + $0x60] sm:$0xff]
    %v723 = vld [vmem:[#allocation7 + $0x68] sm:$0xff]
    %v724 = vld [vmem:[#allocation7 + $0x70] sm:$0xff]
    %v725 = vld [vmem:[#allocation7 + $0x78] sm:$0xff]
    %v726 = vld [vmem:[#allocation7 + $0x80] sm:$0xff]
    %v727 = vld [vmem:[#allocation7 + $0x88] sm:$0xff]
    %v728 = vld [vmem:[#allocation7 + $0x90] sm:$0xff]
    %v729 = vld [vmem:[#allocation7 + $0x98] sm:$0xff]
    %v730 = vld [vmem:[#allocation7 + $0xa0] sm:$0xff]
    %v731 = vld [vmem:[#allocation7 + $0xa8] sm:$0xff]
    %v732 = vld [vmem:[#allocation7 + $0xb0] sm:$0xff]
    %v733 = vld [vmem:[#allocation7 + $0xb8] sm:$0xff]
    %v734 = vld [vmem:[#allocation7 + $0xc0] sm:$0xff]
    %v735 = vld [vmem:[#allocation7 + $0xc8] sm:$0xff]
    %v736 = vld [vmem:[#allocation7 + $0xd0] sm:$0xff]
    %v737 = vld [vmem:[#allocation7 + $0xd8] sm:$0xff]
    %v738 = vld [vmem:[#allocation7 + $0xe0] sm:$0xff]
    %v739 = vld [vmem:[#allocation7 + $0xe8] sm:$0xff]
    %v740 = vld [vmem:[#allocation7 + $0xf0] sm:$0xff]
    %v741 = vld [vmem:[#allocation7 + $0xf8] sm:$0xff]
    %v742 = vld [vmem:[%s4] sm:$0x1]
    %v744 = vlaneseq
    %v745 = vshrl.u32 %v744, 7
    %v746 = vsub.s32 0, %v745
    %v747 = vrot.slane %v742, %v746
    %749 = vmatprep.subr.mxu0 0.0
    %750 = vmatpush1.msra.mxu0 %v710
    %751 = vmatprep.subr.mxu0 0.0
    %752 = vmatpush1.msra.mxu0 %v711
    %753 = vmatprep.subr.mxu0 0.0
    %754 = vmatpush1.msra.mxu0 %v712
    %755 = vmatprep.subr.mxu0 0.0
    %756 = vmatpush1.msra.mxu0 %v713
    %757 = vmatprep.subr.mxu0 0.0
    %758 = vmatpush1.msra.mxu0 %v714
    %759 = vmatprep.subr.mxu0 0.0
    %760 = vmatpush1.msra.mxu0 %v715
    %761 = vmatprep.subr.mxu0 0.0
    %762 = vmatpush1.msra.mxu0 %v716
    %763 = vmatprep.subr.mxu0 0.0
    %764 = vmatpush1.msra.mxu0 %v717
    %765 = vmatprep.subr.mxu0 0.0
    %766 = vmatpush1.msra.mxu0 %v718
    %767 = vmatprep.subr.mxu0 0.0
    %768 = vmatpush1.msra.mxu0 %v719
    %769 = vmatprep.subr.mxu0 0.0
    %770 = vmatpush1.msra.mxu0 %v720
    %771 = vmatprep.subr.mxu0 0.0
    %772 = vmatpush1.msra.mxu0 %v721
    %773 = vmatprep.subr.mxu0 0.0
    %774 = vmatpush1.msra.mxu0 %v722
    %775 = vmatprep.subr.mxu0 0.0
    %776 = vmatpush1.msra.mxu0 %v723
    %777 = vmatprep.subr.mxu0 0.0
    %778 = vmatpush1.msra.mxu0 %v724
    %779 = vmatprep.subr.mxu0 0.0
    %780 = vmatpush1.msra.mxu0 %v725
    %781 = vmatprep.subr.mxu0 0.0
    %782 = vmatpush1.msra.mxu0 %v726
    %783 = vmatprep.subr.mxu0 0.0
    %784 = vmatpush1.msra.mxu0 %v727
    %785 = vmatprep.subr.mxu0 0.0
    %786 = vmatpush1.msra.mxu0 %v728
    %787 = vmatprep.subr.mxu0 0.0
    %788 = vmatpush1.msra.mxu0 %v729
    %789 = vmatprep.subr.mxu0 0.0
    %790 = vmatpush1.msra.mxu0 %v730
    %791 = vmatprep.subr.mxu0 0.0
    %792 = vmatpush1.msra.mxu0 %v731
    %793 = vmatprep.subr.mxu0 0.0
    %794 = vmatpush1.msra.mxu0 %v732
    %795 = vmatprep.subr.mxu0 0.0
    %796 = vmatpush1.msra.mxu0 %v733
    %797 = vmatprep.subr.mxu0 0.0
    %798 = vmatpush1.msra.mxu0 %v734
    %799 = vmatprep.subr.mxu0 0.0
    %800 = vmatpush1.msra.mxu0 %v735
    %801 = vmatprep.subr.mxu0 0.0
    %802 = vmatpush1.msra.mxu0 %v736
    %803 = vmatprep.subr.mxu0 0.0
    %804 = vmatpush1.msra.mxu0 %v737
    %805 = vmatprep.subr.mxu0 0.0
    %806 = vmatpush1.msra.mxu0 %v738
    %807 = vmatprep.subr.mxu0 0.0
    %808 = vmatpush1.msra.mxu0 %v739
    %809 = vmatprep.subr.mxu0 0.0
    %810 = vmatpush1.msra.mxu0 %v740
    %811 = vmatprep.subr.mxu0 0.0
    %812 = vmatpush1.msra.mxu0 %v741
    %813 = vmatprep.mubr.f32.mxu0 %v707
    %814 = vmatmul.mubr.f32.gmra.mrb[0].mxu0 %v706
    %v815 = vpop.f32.mrb[0].mxu0
    %v816 = vadd.f32 %v747, %v815
    %v817 = vpop.f32.mrb[0].mxu0
    %818 = vmatprep.mubr.f32.mxu0 %v709
    %819 = vmatmul.mubr.f32.gmra.mrb[0].mxu0 %v708
    %v820 = vpop.f32.mrb[0].mxu0
    %v821 = vadd.f32 %v747, %v820
    %v822 = vpop.f32.mrb[0].mxu0
    %823 = vdwg.mxu0
    %v824 = vmax.f32 %v816, 0.0
    %v825 = vmax.f32 %v821, 0.0
    %826 = vst [vmem:[#allocation8] sm:$0xff] %v824
    %827 = vst [vmem:[#allocation8 + $0x8] sm:$0xff] %v825
    // Predicated region
    $region34: #{tpu_custom_call.1} parent=1 // pred_check
      _
    $region35: #{tpu_custom_call.1} parent=1 // pred_check_branch
      %829 = sbr.rel (0) target = $region37
    $region36: #{tpu_custom_call.1} parent=1 // pred_region
      %s831 = ssub.s32 256, 256
      %832 = vsyncadd [#allocation4], %s831
      %s833 = sshll.u32 [#allocation8], 4
      %s834 = int_to_ptr.vmem [resolvable:$true] %s833
      %839 = dma.vmem_to_hbm [thread:$0]  %s834, 256, %s5, [#allocation4], 128, 128, 8
    $region37: #{tpu_custom_call.1} parent=1 // pred_fallthru
      _
    // Predicated region
    $region38: #{tpu_custom_call.1} parent=1 // pred_check
      _
    $region39: #{tpu_custom_call.1} parent=1 // pred_check_branch
      %841 = sbr.rel (0) target = $region41
    $region40: #{tpu_custom_call.1} parent=1 // pred_region
      %842 = dma.done [#allocation4], 256
    $region41: #{tpu_custom_call.1} parent=1 // pred_fallthru
      _
    %843 = vsyncpa [#allocation3], 1
    %844 = vsyncpa [#allocation6], 1
    %845 = vsyncpa [#allocation4], 1

</llo_original>
